<compile_context>
chip_gen: v7x
topology: tpu7x:2x2x1
jax: 0.10.0
libtpu: 0.0.40
codegen_flags: <defaults>
</compile_context>

<pallas_src>
import jax
import jax.numpy as jnp
from jax import lax
from jax.experimental import pallas as pl
from jax.experimental.pallas import tpu as pltpu

_LANES = 128
_ROW_CAP = 512          # sublane rows per hw tile (multiple of 8)
_CLASS_CHUNK_CAP = 8    # classes folded into one grid step / one target fetch


def _round_up(x, m):
    return ((x + m - 1) // m) * m


def _pick_class_chunk(c, cap=_CLASS_CHUNK_CAP):
    """Classes per grid step.  Prefer an exact divisor of C so the class axis
    has no partial blocks; otherwise accept a partial last block (its garbage
    slots are sliced away in the wrapper before any reduction)."""
    if c <= cap:
        return c
    for d in range(cap, 3, -1):
        if c % d == 0:
            return d
    return cap


def _make_dice_stats_kernel(cc, rows, hwb, n_hw_s, need_mask):
    def kernel(x_ref, t_ref, out_ref):
        # grid = (split, n, class_block, hw_block); hw (axis 3) is the reduction.
        cb = pl.program_id(2)
        h = pl.program_id(3)

        @pl.when(h == 0)
        def _():
            out_ref[...] = jnp.zeros_like(out_ref)

        t = t_ref[0]                                    # (rows, 128) int32, -1 = pad

        if need_mask:
            # Ragged hw tail and/or the overshoot step of the 2-way hw split:
            # zero out rows whose global index falls outside the real hw range.
            s = pl.program_id(0)
            row_ids = lax.broadcasted_iota(jnp.int32, (rows, _LANES), 0)
            g = s * n_hw_s + h                          # unclamped hw-block index
            valid = (g * rows + row_ids) < hwb
            t = jnp.where(valid, t, -1)

        base = cb * cc
        for j in range(cc):                             # cc small & static: unrolled
            xj = x_ref[0, j].astype(jnp.float32)        # (rows, 128), class base+j
            m = t == base + j                           # pad (-1) never matches
            xs = jnp.where(valid, xj, 0.0) if need_mask else xj

            # Sublane-only partial reductions; the 128-lane reduce is done in JAX.
            inter = jnp.sum(jnp.where(m, xj, 0.0), axis=0, keepdims=True)   # (1,128)
            insum = jnp.sum(xs, axis=0, keepdims=True)                      # (1,128)
            tsum = jnp.sum(m.astype(jnp.float32), axis=0, keepdims=True)    # (1,128)

            out_ref[0, 0, 0, pl.ds(j, 1)] = out_ref[0, 0, 0, pl.ds(j, 1)] + inter
            out_ref[0, 0, 0, pl.ds(cc + j, 1)] = out_ref[0, 0, 0, pl.ds(cc + j, 1)] + insum
            out_ref[0, 0, 0, pl.ds(2 * cc + j, 1)] = out_ref[0, 0, 0, pl.ds(2 * cc + j, 1)] + tsum

    return kernel


def multiclass_dice_loss(inputs, target, weights=None, cls_num=None, row_cap=_ROW_CAP):
    """inputs: (N, C, H, W) float scores; target: (N, H, W) integer class ids."""
    N, C, H, W = inputs.shape
    if cls_num is None:
        cls_num = C
    assert cls_num == C, "cls_num must match the channel dim of `inputs`"
    row_cap = max(8, _round_up(int(row_cap), 8))

    if weights is None:
        w = jnp.ones((C,), jnp.float32)
    else:
        w = jnp.asarray(weights, jnp.float32)

    # ---- layout plumbing (reshape of contiguous NCHW is free) ----
    hw = H * W
    x_flat = inputs.reshape(N, C, hw)
    t_flat = target.reshape(N, hw).astype(jnp.int32)

    # Lane alignment only: pads (one extra copy) ONLY when H*W is not a
    # multiple of 128 — typical segmentation shapes need no pad at all.
    # Pad values x=0 / t=-1 contribute nothing to any per-class sum.
    hw_pad = _round_up(hw, _LANES)
    if hw_pad != hw:
        x_flat = jnp.pad(x_flat, ((0, 0), (0, 0), (0, hw_pad - hw)))
        t_flat = jnp.pad(t_flat, ((0, 0), (0, hw_pad - hw)), constant_values=-1)
    hwb = hw_pad // _LANES

    x4 = x_flat.reshape(N, C, hwb, _LANES)
    t3 = t_flat.reshape(N, hwb, _LANES)

    # hw (sublane-row) tiling; the ragged last tile is masked in-kernel, so no
    # rows-granularity padding copy of the input is ever made.
    if hwb <= row_cap:
        rows, n_hw = hwb, 1
    else:
        rows = row_cap
        n_hw = pl.cdiv(hwb, rows)
        if n_hw % 2:  # prefer an even block count so the 2-TC split is waste-free
            rows = max(8, _round_up(pl.cdiv(hwb, n_hw + 1), 8))
            n_hw = pl.cdiv(hwb, rows)

    # Class chunking: cc classes share one target fetch per hw tile.
    cc = _pick_class_chunk(C)
    n_cblk = pl.cdiv(C, cc)

    # v7x: split the hw reduction over a leading parallel grid axis so both
    # TensorCores get work even when N * n_cblk is tiny.
    split = 2 if n_hw >= 2 else 1
    n_hw_s = pl.cdiv(n_hw, split)

    need_mask = (n_hw * rows != hwb) or (split * n_hw_s != n_hw)

    def x_map(s, n, cb, h):
        return (n, cb, jnp.minimum(s * n_hw_s + h, n_hw - 1), 0)

    def t_map(s, n, cb, h):
        return (n, jnp.minimum(s * n_hw_s + h, n_hw - 1), 0)

    def o_map(s, n, cb, h):
        return (s, n, cb, 0, 0)

    kernel = _make_dice_stats_kernel(cc, rows, hwb, n_hw_s, need_mask)

    stats = pl.pallas_call(
        kernel,
        out_shape=jax.ShapeDtypeStruct((split, N, n_cblk, 3 * cc, _LANES), jnp.float32),
        grid=(split, N, n_cblk, n_hw_s),
        in_specs=[
            pl.BlockSpec((1, cc, rows, _LANES), x_map),
            pl.BlockSpec((1, rows, _LANES), t_map),
        ],
        out_specs=pl.BlockSpec((1, 1, 1, 3 * cc, _LANES), o_map),
        compiler_params=pltpu.CompilerParams(
            dimension_semantics=("parallel", "parallel", "parallel", "arbitrary"),
            vmem_limit_bytes=32 * 1024 * 1024),
    )(x4, t3)

    # ---- tiny dice combine in plain JAX ----
    st = stats.sum(axis=0).sum(axis=-1)                         # (N, n_cblk, 3*cc)
    st = st.reshape(N, n_cblk, 3, cc)
    st = jnp.moveaxis(st, 2, 1).reshape(N, 3, n_cblk * cc)[:, :, :C]   # drop pad classes
    inter, insum, tsum = st[:, 0], st[:, 1], st[:, 2]            # each (N, C)

    smooth = jnp.float32(1.0)
    dice = 2.0 * (inter + smooth) / (insum + tsum + smooth)      # (N, C)
    loss_per_class = 1.0 - dice.sum(0) / jnp.float32(N)          # (C,)
    return jnp.sum(loss_per_class * w)


def _reference(inputs, target, weights=None):
    N, C, H, W = inputs.shape
    onehot = jax.nn.one_hot(target, C, axis=1, dtype=jnp.float32)  # (N,C,H,W)
    total = 0.0
    for c in range(C):
        xf = inputs[:, c].reshape(N, -1)
        tf = onehot[:, c].reshape(N, -1)
        inter = (xf * tf).sum(1)
        dice = 2 * (inter + 1) / (xf.sum(1) + tf.sum(1) + 1)
        loss = 1 - dice.sum() / N
        if weights is not None:
            loss = loss * weights[c]
        total = total + loss
    return total


if __name__ == "__main__":
    key = jax.random.PRNGKey(0)

    def _check(n, c, h, w_, weights=None, row_cap=_ROW_CAP):
        kx, kt = jax.random.split(jax.random.fold_in(key, n * 10000 + c * 100 + h + w_))
        x = jax.random.uniform(kx, (n, c, h, w_), dtype=jnp.float32)
        t = jax.random.randint(kt, (n, h, w_), 0, c, dtype=jnp.int32)
        got = jax.block_until_ready(
            multiclass_dice_loss(x, t, weights=weights, cls_num=c, row_cap=row_cap))
        ref = _reference(x, t, weights=weights)
        assert jnp.allclose(got, ref, rtol=1e-5, atol=1e-5), (got, ref)

    # base case, unweighted + weighted
    _check(2, 4, 16, 16)
    _check(2, 4, 16, 16, weights=jnp.asarray([0.5, 1.0, 2.0, 1.5], jnp.float32))
    # multiple class blocks + 2-way hw split + overshoot/ragged masking
    _check(1, 10, 48, 64, row_cap=8)
    # H*W not a multiple of 128 (lane-pad fallback path, pad value -1)
    _check(1, 3, 9, 7)

    print("KERNEL_OK")
</pallas_src>

<mosaic_0001>
module attributes {stable_mosaic.version = 11 : i64} {
  func.func @kernel(%arg0: i32, %arg1: i32, %arg2: i32, %arg3: i32, %arg4: memref<1x4x2x128xf32, #tpu.memory_space<vmem>>, %arg5: memref<1x2x128xi32, #tpu.memory_space<vmem>>, %arg6: memref<1x1x1x12x128xf32, #tpu.memory_space<vmem>>) attributes {dimension_semantics = [#tpu.dimension_semantics<parallel>, #tpu.dimension_semantics<parallel>, #tpu.dimension_semantics<parallel>, #tpu.dimension_semantics<arbitrary>], iteration_bounds = array<i64: 1, 2, 1, 1>, scalar_prefetch = 0 : i64, scratch_operands = 0 : i64, tpu.core_type = #tpu.core_type<tc>, window_params = [{transform_indices = @transform_0, window_bounds = array<i64: 1, 4, 2, 128>}, {transform_indices = @transform_1, window_bounds = array<i64: 1, 2, 128>}, {transform_indices = @transform_2, window_bounds = array<i64: 1, 1, 1, 12, 128>}]} {
    %c0_i32 = arith.constant 0 : i32
    %0 = arith.cmpi eq, %arg3, %c0_i32 : i32
    %1 = arith.extui %0 : i1 to i32
    %c0_i32_0 = arith.constant 0 : i32
    %2 = arith.cmpi ne, %1, %c0_i32_0 : i32
    scf.if %2 {
      %cst_144 = arith.constant 0.000000e+00 : f32
      %138 = vector.broadcast %cst_144 : f32 to vector<1x1x1x12x128xf32>
      %c0_145 = arith.constant 0 : index
      %c0_146 = arith.constant 0 : index
      %c0_147 = arith.constant 0 : index
      %c0_148 = arith.constant 0 : index
      %c0_149 = arith.constant 0 : index
      %139 = vector.load %arg6[%c0_145, %c0_146, %c0_147, %c0_148, %c0_149] : memref<1x1x1x12x128xf32, #tpu.memory_space<vmem>>, vector<1x1x1x12x128xf32>
      tpu.vector_store %arg6[%c0_145, %c0_146, %c0_147, %c0_148, %c0_149], %138 {strides = array<i32>} : memref<1x1x1x12x128xf32, #tpu.memory_space<vmem>>, vector<1x1x1x12x128xf32>,
    } else {
    }
    %c0 = arith.constant 0 : index
    %c0_1 = arith.constant 0 : index
    %c0_2 = arith.constant 0 : index
    %3 = vector.load %arg5[%c0, %c0_1, %c0_2] : memref<1x2x128xi32, #tpu.memory_space<vmem>>, vector<1x2x128xi32>
    %4 = vector.shape_cast %3 : vector<1x2x128xi32> to vector<2x128xi32>
    %c4_i32 = arith.constant 4 : i32
    %5 = arith.muli %arg2, %c4_i32 : i32
    %c0_3 = arith.constant 0 : index
    %c0_4 = arith.constant 0 : index
    %c0_5 = arith.constant 0 : index
    %c0_6 = arith.constant 0 : index
    %6 = vector.load %arg4[%c0_3, %c0_4, %c0_5, %c0_6] : memref<1x4x2x128xf32, #tpu.memory_space<vmem>>, vector<1x1x2x128xf32>
    %7 = vector.shape_cast %6 : vector<1x1x2x128xf32> to vector<2x128xf32>
    %c0_i32_7 = arith.constant 0 : i32
    %8 = arith.addi %5, %c0_i32_7 : i32
    %9 = vector.broadcast %8 : i32 to vector<2x128xi32>
    %10 = arith.cmpi eq, %4, %9 : vector<2x128xi32>
    %cst = arith.constant 0.000000e+00 : f32
    %11 = vector.broadcast %cst : f32 to vector<2x128xf32>
    %12 = arith.select %10, %7, %11 : vector<2x128xi1>, vector<2x128xf32>
    %cst_8 = arith.constant dense<0.000000e+00> : vector<128xf32>
    %13 = vector.multi_reduction <add>, %12, %cst_8 [0] : vector<2x128xf32> to vector<128xf32>
    %14 = vector.shape_cast %13 : vector<128xf32> to vector<1x128xf32>
    %cst_9 = arith.constant dense<0.000000e+00> : vector<128xf32>
    %15 = vector.multi_reduction <add>, %7, %cst_9 [0] : vector<2x128xf32> to vector<128xf32>
    %16 = vector.shape_cast %15 : vector<128xf32> to vector<1x128xf32>
    %17 = arith.extui %10 : vector<2x128xi1> to vector<2x128xi32>
    %18 = arith.sitofp %17 : vector<2x128xi32> to vector<2x128xf32>
    %cst_10 = arith.constant dense<0.000000e+00> : vector<128xf32>
    %19 = vector.multi_reduction <add>, %18, %cst_10 [0] : vector<2x128xf32> to vector<128xf32>
    %20 = vector.shape_cast %19 : vector<128xf32> to vector<1x128xf32>
    %c0_11 = arith.constant 0 : index
    %c0_12 = arith.constant 0 : index
    %c0_13 = arith.constant 0 : index
    %c0_14 = arith.constant 0 : index
    %c0_15 = arith.constant 0 : index
    %21 = vector.load %arg6[%c0_11, %c0_12, %c0_13, %c0_14, %c0_15] : memref<1x1x1x12x128xf32, #tpu.memory_space<vmem>>, vector<1x1x1x1x128xf32>
    %22 = vector.shape_cast %21 : vector<1x1x1x1x128xf32> to vector<1x128xf32>
    %23 = arith.addf %22, %14 : vector<1x128xf32>
    %c0_16 = arith.constant 0 : index
    %c0_17 = arith.constant 0 : index
    %c0_18 = arith.constant 0 : index
    %c0_19 = arith.constant 0 : index
    %c0_20 = arith.constant 0 : index
    %24 = vector.load %arg6[%c0_16, %c0_17, %c0_18, %c0_19, %c0_20] : memref<1x1x1x12x128xf32, #tpu.memory_space<vmem>>, vector<1x1x1x1x128xf32>
    %25 = vector.shape_cast %24 : vector<1x1x1x1x128xf32> to vector<1x128xf32>
    %26 = vector.shape_cast %23 : vector<1x128xf32> to vector<1x1x1x1x128xf32>
    tpu.vector_store %arg6[%c0_16, %c0_17, %c0_18, %c0_19, %c0_20], %26 {strides = array<i32>} : memref<1x1x1x12x128xf32, #tpu.memory_space<vmem>>, vector<1x1x1x1x128xf32>,
    %c0_21 = arith.constant 0 : index
    %c0_22 = arith.constant 0 : index
    %c0_23 = arith.constant 0 : index
    %c4 = arith.constant 4 : index
    %c0_24 = arith.constant 0 : index
    %27 = vector.load %arg6[%c0_21, %c0_22, %c0_23, %c4, %c0_24] : memref<1x1x1x12x128xf32, #tpu.memory_space<vmem>>, vector<1x1x1x1x128xf32>
    %28 = vector.shape_cast %27 : vector<1x1x1x1x128xf32> to vector<1x128xf32>
    %29 = arith.addf %28, %16 : vector<1x128xf32>
    %c0_25 = arith.constant 0 : index
    %c0_26 = arith.constant 0 : index
    %c0_27 = arith.constant 0 : index
    %c4_28 = arith.constant 4 : index
    %c0_29 = arith.constant 0 : index
    %30 = vector.load %arg6[%c0_25, %c0_26, %c0_27, %c4_28, %c0_29] : memref<1x1x1x12x128xf32, #tpu.memory_space<vmem>>, vector<1x1x1x1x128xf32>
    %31 = vector.shape_cast %30 : vector<1x1x1x1x128xf32> to vector<1x128xf32>
    %32 = vector.shape_cast %29 : vector<1x128xf32> to vector<1x1x1x1x128xf32>
    tpu.vector_store %arg6[%c0_25, %c0_26, %c0_27, %c4_28, %c0_29], %32 {strides = array<i32>} : memref<1x1x1x12x128xf32, #tpu.memory_space<vmem>>, vector<1x1x1x1x128xf32>,
    %c0_30 = arith.constant 0 : index
    %c0_31 = arith.constant 0 : index
    %c0_32 = arith.constant 0 : index
    %c8 = arith.constant 8 : index
    %c0_33 = arith.constant 0 : index
    %33 = vector.load %arg6[%c0_30, %c0_31, %c0_32, %c8, %c0_33] : memref<1x1x1x12x128xf32, #tpu.memory_space<vmem>>, vector<1x1x1x1x128xf32>
    %34 = vector.shape_cast %33 : vector<1x1x1x1x128xf32> to vector<1x128xf32>
    %35 = arith.addf %34, %20 : vector<1x128xf32>
    %c0_34 = arith.constant 0 : index
    %c0_35 = arith.constant 0 : index
    %c0_36 = arith.constant 0 : index
    %c8_37 = arith.constant 8 : index
    %c0_38 = arith.constant 0 : index
    %36 = vector.load %arg6[%c0_34, %c0_35, %c0_36, %c8_37, %c0_38] : memref<1x1x1x12x128xf32, #tpu.memory_space<vmem>>, vector<1x1x1x1x128xf32>
    %37 = vector.shape_cast %36 : vector<1x1x1x1x128xf32> to vector<1x128xf32>
    %38 = vector.shape_cast %35 : vector<1x128xf32> to vector<1x1x1x1x128xf32>
    tpu.vector_store %arg6[%c0_34, %c0_35, %c0_36, %c8_37, %c0_38], %38 {strides = array<i32>} : memref<1x1x1x12x128xf32, #tpu.memory_space<vmem>>, vector<1x1x1x1x128xf32>,
    %c0_39 = arith.constant 0 : index
    %c1 = arith.constant 1 : index
    %c0_40 = arith.constant 0 : index
    %c0_41 = arith.constant 0 : index
    %39 = vector.load %arg4[%c0_39, %c1, %c0_40, %c0_41] : memref<1x4x2x128xf32, #tpu.memory_space<vmem>>, vector<1x1x2x128xf32>
    %40 = vector.shape_cast %39 : vector<1x1x2x128xf32> to vector<2x128xf32>
    %c1_i32 = arith.constant 1 : i32
    %41 = arith.addi %5, %c1_i32 : i32
    %42 = vector.broadcast %41 : i32 to vector<2x128xi32>
    %43 = arith.cmpi eq, %4, %42 : vector<2x128xi32>
    %cst_42 = arith.constant 0.000000e+00 : f32
    %44 = vector.broadcast %cst_42 : f32 to vector<2x128xf32>
    %45 = arith.select %43, %40, %44 : vector<2x128xi1>, vector<2x128xf32>
    %cst_43 = arith.constant dense<0.000000e+00> : vector<128xf32>
    %46 = vector.multi_reduction <add>, %45, %cst_43 [0] : vector<2x128xf32> to vector<128xf32>
    %47 = vector.shape_cast %46 : vector<128xf32> to vector<1x128xf32>
    %cst_44 = arith.constant dense<0.000000e+00> : vector<128xf32>
    %48 = vector.multi_reduction <add>, %40, %cst_44 [0] : vector<2x128xf32> to vector<128xf32>
    %49 = vector.shape_cast %48 : vector<128xf32> to vector<1x128xf32>
    %50 = arith.extui %43 : vector<2x128xi1> to vector<2x128xi32>
    %51 = arith.sitofp %50 : vector<2x128xi32> to vector<2x128xf32>
    %cst_45 = arith.constant dense<0.000000e+00> : vector<128xf32>
    %52 = vector.multi_reduction <add>, %51, %cst_45 [0] : vector<2x128xf32> to vector<128xf32>
    %53 = vector.shape_cast %52 : vector<128xf32> to vector<1x128xf32>
    %c0_46 = arith.constant 0 : index
    %c0_47 = arith.constant 0 : index
    %c0_48 = arith.constant 0 : index
    %c1_49 = arith.constant 1 : index
    %c0_50 = arith.constant 0 : index
    %54 = vector.load %arg6[%c0_46, %c0_47, %c0_48, %c1_49, %c0_50] : memref<1x1x1x12x128xf32, #tpu.memory_space<vmem>>, vector<1x1x1x1x128xf32>
    %55 = vector.shape_cast %54 : vector<1x1x1x1x128xf32> to vector<1x128xf32>
    %56 = arith.addf %55, %47 : vector<1x128xf32>
    %c0_51 = arith.constant 0 : index
    %c0_52 = arith.constant 0 : index
    %c0_53 = arith.constant 0 : index
    %c1_54 = arith.constant 1 : index
    %c0_55 = arith.constant 0 : index
    %57 = vector.load %arg6[%c0_51, %c0_52, %c0_53, %c1_54, %c0_55] : memref<1x1x1x12x128xf32, #tpu.memory_space<vmem>>, vector<1x1x1x1x128xf32>
    %58 = vector.shape_cast %57 : vector<1x1x1x1x128xf32> to vector<1x128xf32>
    %59 = vector.shape_cast %56 : vector<1x128xf32> to vector<1x1x1x1x128xf32>
    tpu.vector_store %arg6[%c0_51, %c0_52, %c0_53, %c1_54, %c0_55], %59 {strides = array<i32>} : memref<1x1x1x12x128xf32, #tpu.memory_space<vmem>>, vector<1x1x1x1x128xf32>,
    %c0_56 = arith.constant 0 : index
    %c0_57 = arith.constant 0 : index
    %c0_58 = arith.constant 0 : index
    %c5 = arith.constant 5 : index
    %c0_59 = arith.constant 0 : index
    %60 = vector.load %arg6[%c0_56, %c0_57, %c0_58, %c5, %c0_59] : memref<1x1x1x12x128xf32, #tpu.memory_space<vmem>>, vector<1x1x1x1x128xf32>
    %61 = vector.shape_cast %60 : vector<1x1x1x1x128xf32> to vector<1x128xf32>
    %62 = arith.addf %61, %49 : vector<1x128xf32>
    %c0_60 = arith.constant 0 : index
    %c0_61 = arith.constant 0 : index
    %c0_62 = arith.constant 0 : index
    %c5_63 = arith.constant 5 : index
    %c0_64 = arith.constant 0 : index
    %63 = vector.load %arg6[%c0_60, %c0_61, %c0_62, %c5_63, %c0_64] : memref<1x1x1x12x128xf32, #tpu.memory_space<vmem>>, vector<1x1x1x1x128xf32>
    %64 = vector.shape_cast %63 : vector<1x1x1x1x128xf32> to vector<1x128xf32>
    %65 = vector.shape_cast %62 : vector<1x128xf32> to vector<1x1x1x1x128xf32>
    tpu.vector_store %arg6[%c0_60, %c0_61, %c0_62, %c5_63, %c0_64], %65 {strides = array<i32>} : memref<1x1x1x12x128xf32, #tpu.memory_space<vmem>>, vector<1x1x1x1x128xf32>,
    %c0_65 = arith.constant 0 : index
    %c0_66 = arith.constant 0 : index
    %c0_67 = arith.constant 0 : index
    %c9 = arith.constant 9 : index
    %c0_68 = arith.constant 0 : index
    %66 = vector.load %arg6[%c0_65, %c0_66, %c0_67, %c9, %c0_68] : memref<1x1x1x12x128xf32, #tpu.memory_space<vmem>>, vector<1x1x1x1x128xf32>
    %67 = vector.shape_cast %66 : vector<1x1x1x1x128xf32> to vector<1x128xf32>
    %68 = arith.addf %67, %53 : vector<1x128xf32>
    %c0_69 = arith.constant 0 : index
    %c0_70 = arith.constant 0 : index
    %c0_71 = arith.constant 0 : index
    %c9_72 = arith.constant 9 : index
    %c0_73 = arith.constant 0 : index
    %69 = vector.load %arg6[%c0_69, %c0_70, %c0_71, %c9_72, %c0_73] : memref<1x1x1x12x128xf32, #tpu.memory_space<vmem>>, vector<1x1x1x1x128xf32>
    %70 = vector.shape_cast %69 : vector<1x1x1x1x128xf32> to vector<1x128xf32>
    %71 = vector.shape_cast %68 : vector<1x128xf32> to vector<1x1x1x1x128xf32>
    tpu.vector_store %arg6[%c0_69, %c0_70, %c0_71, %c9_72, %c0_73], %71 {strides = array<i32>} : memref<1x1x1x12x128xf32, #tpu.memory_space<vmem>>, vector<1x1x1x1x128xf32>,
    %c0_74 = arith.constant 0 : index
    %c2 = arith.constant 2 : index
    %c0_75 = arith.constant 0 : index
    %c0_76 = arith.constant 0 : index
    %72 = vector.load %arg4[%c0_74, %c2, %c0_75, %c0_76] : memref<1x4x2x128xf32, #tpu.memory_space<vmem>>, vector<1x1x2x128xf32>
    %73 = vector.shape_cast %72 : vector<1x1x2x128xf32> to vector<2x128xf32>
    %c2_i32 = arith.constant 2 : i32
    %74 = arith.addi %5, %c2_i32 : i32
    %75 = vector.broadcast %74 : i32 to vector<2x128xi32>
    %76 = arith.cmpi eq, %4, %75 : vector<2x128xi32>
    %cst_77 = arith.constant 0.000000e+00 : f32
    %77 = vector.broadcast %cst_77 : f32 to vector<2x128xf32>
    %78 = arith.select %76, %73, %77 : vector<2x128xi1>, vector<2x128xf32>
    %cst_78 = arith.constant dense<0.000000e+00> : vector<128xf32>
    %79 = vector.multi_reduction <add>, %78, %cst_78 [0] : vector<2x128xf32> to vector<128xf32>
    %80 = vector.shape_cast %79 : vector<128xf32> to vector<1x128xf32>
    %cst_79 = arith.constant dense<0.000000e+00> : vector<128xf32>
    %81 = vector.multi_reduction <add>, %73, %cst_79 [0] : vector<2x128xf32> to vector<128xf32>
    %82 = vector.shape_cast %81 : vector<128xf32> to vector<1x128xf32>
    %83 = arith.extui %76 : vector<2x128xi1> to vector<2x128xi32>
    %84 = arith.sitofp %83 : vector<2x128xi32> to vector<2x128xf32>
    %cst_80 = arith.constant dense<0.000000e+00> : vector<128xf32>
    %85 = vector.multi_reduction <add>, %84, %cst_80 [0] : vector<2x128xf32> to vector<128xf32>
    %86 = vector.shape_cast %85 : vector<128xf32> to vector<1x128xf32>
    %c0_81 = arith.constant 0 : index
    %c0_82 = arith.constant 0 : index
    %c0_83 = arith.constant 0 : index
    %c2_84 = arith.constant 2 : index
    %c0_85 = arith.constant 0 : index
    %87 = vector.load %arg6[%c0_81, %c0_82, %c0_83, %c2_84, %c0_85] : memref<1x1x1x12x128xf32, #tpu.memory_space<vmem>>, vector<1x1x1x1x128xf32>
    %88 = vector.shape_cast %87 : vector<1x1x1x1x128xf32> to vector<1x128xf32>
    %89 = arith.addf %88, %80 : vector<1x128xf32>
    %c0_86 = arith.constant 0 : index
    %c0_87 = arith.constant 0 : index
    %c0_88 = arith.constant 0 : index
    %c2_89 = arith.constant 2 : index
    %c0_90 = arith.constant 0 : index
    %90 = vector.load %arg6[%c0_86, %c0_87, %c0_88, %c2_89, %c0_90] : memref<1x1x1x12x128xf32, #tpu.memory_space<vmem>>, vector<1x1x1x1x128xf32>
    %91 = vector.shape_cast %90 : vector<1x1x1x1x128xf32> to vector<1x128xf32>
    %92 = vector.shape_cast %89 : vector<1x128xf32> to vector<1x1x1x1x128xf32>
    tpu.vector_store %arg6[%c0_86, %c0_87, %c0_88, %c2_89, %c0_90], %92 {strides = array<i32>} : memref<1x1x1x12x128xf32, #tpu.memory_space<vmem>>, vector<1x1x1x1x128xf32>,
    %c0_91 = arith.constant 0 : index
    %c0_92 = arith.constant 0 : index
    %c0_93 = arith.constant 0 : index
    %c6 = arith.constant 6 : index
    %c0_94 = arith.constant 0 : index
    %93 = vector.load %arg6[%c0_91, %c0_92, %c0_93, %c6, %c0_94] : memref<1x1x1x12x128xf32, #tpu.memory_space<vmem>>, vector<1x1x1x1x128xf32>
    %94 = vector.shape_cast %93 : vector<1x1x1x1x128xf32> to vector<1x128xf32>
    %95 = arith.addf %94, %82 : vector<1x128xf32>
    %c0_95 = arith.constant 0 : index
    %c0_96 = arith.constant 0 : index
    %c0_97 = arith.constant 0 : index
    %c6_98 = arith.constant 6 : index
    %c0_99 = arith.constant 0 : index
    %96 = vector.load %arg6[%c0_95, %c0_96, %c0_97, %c6_98, %c0_99] : memref<1x1x1x12x128xf32, #tpu.memory_space<vmem>>, vector<1x1x1x1x128xf32>
    %97 = vector.shape_cast %96 : vector<1x1x1x1x128xf32> to vector<1x128xf32>
    %98 = vector.shape_cast %95 : vector<1x128xf32> to vector<1x1x1x1x128xf32>
    tpu.vector_store %arg6[%c0_95, %c0_96, %c0_97, %c6_98, %c0_99], %98 {strides = array<i32>} : memref<1x1x1x12x128xf32, #tpu.memory_space<vmem>>, vector<1x1x1x1x128xf32>,
    %c0_100 = arith.constant 0 : index
    %c0_101 = arith.constant 0 : index
    %c0_102 = arith.constant 0 : index
    %c10 = arith.constant 10 : index
    %c0_103 = arith.constant 0 : index
    %99 = vector.load %arg6[%c0_100, %c0_101, %c0_102, %c10, %c0_103] : memref<1x1x1x12x128xf32, #tpu.memory_space<vmem>>, vector<1x1x1x1x128xf32>
    %100 = vector.shape_cast %99 : vector<1x1x1x1x128xf32> to vector<1x128xf32>
    %101 = arith.addf %100, %86 : vector<1x128xf32>
    %c0_104 = arith.constant 0 : index
    %c0_105 = arith.constant 0 : index
    %c0_106 = arith.constant 0 : index
    %c10_107 = arith.constant 10 : index
    %c0_108 = arith.constant 0 : index
    %102 = vector.load %arg6[%c0_104, %c0_105, %c0_106, %c10_107, %c0_108] : memref<1x1x1x12x128xf32, #tpu.memory_space<vmem>>, vector<1x1x1x1x128xf32>
    %103 = vector.shape_cast %102 : vector<1x1x1x1x128xf32> to vector<1x128xf32>
    %104 = vector.shape_cast %101 : vector<1x128xf32> to vector<1x1x1x1x128xf32>
    tpu.vector_store %arg6[%c0_104, %c0_105, %c0_106, %c10_107, %c0_108], %104 {strides = array<i32>} : memref<1x1x1x12x128xf32, #tpu.memory_space<vmem>>, vector<1x1x1x1x128xf32>,
    %c0_109 = arith.constant 0 : index
    %c3 = arith.constant 3 : index
    %c0_110 = arith.constant 0 : index
    %c0_111 = arith.constant 0 : index
    %105 = vector.load %arg4[%c0_109, %c3, %c0_110, %c0_111] : memref<1x4x2x128xf32, #tpu.memory_space<vmem>>, vector<1x1x2x128xf32>
    %106 = vector.shape_cast %105 : vector<1x1x2x128xf32> to vector<2x128xf32>
    %c3_i32 = arith.constant 3 : i32
    %107 = arith.addi %5, %c3_i32 : i32
    %108 = vector.broadcast %107 : i32 to vector<2x128xi32>
    %109 = arith.cmpi eq, %4, %108 : vector<2x128xi32>
    %cst_112 = arith.constant 0.000000e+00 : f32
    %110 = vector.broadcast %cst_112 : f32 to vector<2x128xf32>
    %111 = arith.select %109, %106, %110 : vector<2x128xi1>, vector<2x128xf32>
    %cst_113 = arith.constant dense<0.000000e+00> : vector<128xf32>
    %112 = vector.multi_reduction <add>, %111, %cst_113 [0] : vector<2x128xf32> to vector<128xf32>
    %113 = vector.shape_cast %112 : vector<128xf32> to vector<1x128xf32>
    %cst_114 = arith.constant dense<0.000000e+00> : vector<128xf32>
    %114 = vector.multi_reduction <add>, %106, %cst_114 [0] : vector<2x128xf32> to vector<128xf32>
    %115 = vector.shape_cast %114 : vector<128xf32> to vector<1x128xf32>
    %116 = arith.extui %109 : vector<2x128xi1> to vector<2x128xi32>
    %117 = arith.sitofp %116 : vector<2x128xi32> to vector<2x128xf32>
    %cst_115 = arith.constant dense<0.000000e+00> : vector<128xf32>
    %118 = vector.multi_reduction <add>, %117, %cst_115 [0] : vector<2x128xf32> to vector<128xf32>
    %119 = vector.shape_cast %118 : vector<128xf32> to vector<1x128xf32>
    %c0_116 = arith.constant 0 : index
    %c0_117 = arith.constant 0 : index
    %c0_118 = arith.constant 0 : index
    %c3_119 = arith.constant 3 : index
    %c0_120 = arith.constant 0 : index
    %120 = vector.load %arg6[%c0_116, %c0_117, %c0_118, %c3_119, %c0_120] : memref<1x1x1x12x128xf32, #tpu.memory_space<vmem>>, vector<1x1x1x1x128xf32>
    %121 = vector.shape_cast %120 : vector<1x1x1x1x128xf32> to vector<1x128xf32>
    %122 = arith.addf %121, %113 : vector<1x128xf32>
    %c0_121 = arith.constant 0 : index
    %c0_122 = arith.constant 0 : index
    %c0_123 = arith.constant 0 : index
    %c3_124 = arith.constant 3 : index
    %c0_125 = arith.constant 0 : index
    %123 = vector.load %arg6[%c0_121, %c0_122, %c0_123, %c3_124, %c0_125] : memref<1x1x1x12x128xf32, #tpu.memory_space<vmem>>, vector<1x1x1x1x128xf32>
    %124 = vector.shape_cast %123 : vector<1x1x1x1x128xf32> to vector<1x128xf32>
    %125 = vector.shape_cast %122 : vector<1x128xf32> to vector<1x1x1x1x128xf32>
    tpu.vector_store %arg6[%c0_121, %c0_122, %c0_123, %c3_124, %c0_125], %125 {strides = array<i32>} : memref<1x1x1x12x128xf32, #tpu.memory_space<vmem>>, vector<1x1x1x1x128xf32>,
    %c0_126 = arith.constant 0 : index
    %c0_127 = arith.constant 0 : index
    %c0_128 = arith.constant 0 : index
    %c7 = arith.constant 7 : index
    %c0_129 = arith.constant 0 : index
    %126 = vector.load %arg6[%c0_126, %c0_127, %c0_128, %c7, %c0_129] : memref<1x1x1x12x128xf32, #tpu.memory_space<vmem>>, vector<1x1x1x1x128xf32>
    %127 = vector.shape_cast %126 : vector<1x1x1x1x128xf32> to vector<1x128xf32>
    %128 = arith.addf %127, %115 : vector<1x128xf32>
    %c0_130 = arith.constant 0 : index
    %c0_131 = arith.constant 0 : index
    %c0_132 = arith.constant 0 : index
    %c7_133 = arith.constant 7 : index
    %c0_134 = arith.constant 0 : index
    %129 = vector.load %arg6[%c0_130, %c0_131, %c0_132, %c7_133, %c0_134] : memref<1x1x1x12x128xf32, #tpu.memory_space<vmem>>, vector<1x1x1x1x128xf32>
    %130 = vector.shape_cast %129 : vector<1x1x1x1x128xf32> to vector<1x128xf32>
    %131 = vector.shape_cast %128 : vector<1x128xf32> to vector<1x1x1x1x128xf32>
    tpu.vector_store %arg6[%c0_130, %c0_131, %c0_132, %c7_133, %c0_134], %131 {strides = array<i32>} : memref<1x1x1x12x128xf32, #tpu.memory_space<vmem>>, vector<1x1x1x1x128xf32>,
    %c0_135 = arith.constant 0 : index
    %c0_136 = arith.constant 0 : index
    %c0_137 = arith.constant 0 : index
    %c11 = arith.constant 11 : index
    %c0_138 = arith.constant 0 : index
    %132 = vector.load %arg6[%c0_135, %c0_136, %c0_137, %c11, %c0_138] : memref<1x1x1x12x128xf32, #tpu.memory_space<vmem>>, vector<1x1x1x1x128xf32>
    %133 = vector.shape_cast %132 : vector<1x1x1x1x128xf32> to vector<1x128xf32>
    %134 = arith.addf %133, %119 : vector<1x128xf32>
    %c0_139 = arith.constant 0 : index
    %c0_140 = arith.constant 0 : index
    %c0_141 = arith.constant 0 : index
    %c11_142 = arith.constant 11 : index
    %c0_143 = arith.constant 0 : index
    %135 = vector.load %arg6[%c0_139, %c0_140, %c0_141, %c11_142, %c0_143] : memref<1x1x1x12x128xf32, #tpu.memory_space<vmem>>, vector<1x1x1x1x128xf32>
    %136 = vector.shape_cast %135 : vector<1x1x1x1x128xf32> to vector<1x128xf32>
    %137 = vector.shape_cast %134 : vector<1x128xf32> to vector<1x1x1x1x128xf32>
    tpu.vector_store %arg6[%c0_139, %c0_140, %c0_141, %c11_142, %c0_143], %137 {strides = array<i32>} : memref<1x1x1x12x128xf32, #tpu.memory_space<vmem>>, vector<1x1x1x1x128xf32>,
    return
  }
  func.func @transform_0(%arg0: i32, %arg1: i32, %arg2: i32, %arg3: i32) -> (i32, i32, i32, i32) {
    %c1_i32 = arith.constant 1 : i32
    %0 = arith.muli %arg0, %c1_i32 : i32
    %1 = arith.addi %0, %arg3 : i32
    %c0_i32 = arith.constant 0 : i32
    %2 = arith.minsi %1, %c0_i32 : i32
    %c0_i32_0 = arith.constant 0 : i32
    %c0_i32_1 = arith.constant 0 : i32
    return %arg1, %arg2, %2, %c0_i32_0 : i32, i32, i32, i32
  }
  func.func @transform_1(%arg0: i32, %arg1: i32, %arg2: i32, %arg3: i32) -> (i32, i32, i32) {
    %c1_i32 = arith.constant 1 : i32
    %0 = arith.muli %arg0, %c1_i32 : i32
    %1 = arith.addi %0, %arg3 : i32
    %c0_i32 = arith.constant 0 : i32
    %2 = arith.minsi %1, %c0_i32 : i32
    %c0_i32_0 = arith.constant 0 : i32
    %c0_i32_1 = arith.constant 0 : i32
    return %arg1, %2, %c0_i32_0 : i32, i32, i32
  }
  func.func @transform_2(%arg0: i32, %arg1: i32, %arg2: i32, %arg3: i32) -> (i32, i32, i32, i32, i32) {
    %c0_i32 = arith.constant 0 : i32
    %c0_i32_0 = arith.constant 0 : i32
    %c0_i32_1 = arith.constant 0 : i32
    return %arg0, %arg1, %arg2, %c0_i32, %c0_i32_0 : i32, i32, i32, i32, i32
  }
}

</mosaic_0001>

<llo_original>
// kernel: tpu_custom_call.1
$region0: #{tpu_custom_call.1}
  #allocation0 [shape = 'u32[]', space=smem, size = 0x4, offset = 0x4, fixed_abs, tag = 'smem constant byte address 0x4 - core index']
  #allocation1 [shape = 'u32[144,128]{1,0:T(1,128)}', space=vmem, size = 0x12000, scoped, tag = 'internal scratch']
  %s0 = inlined_call_operand.hbm [shape: f32[2,4,2,128], index: 0, kind: input, shape index: {}]
  %s1 = inlined_call_operand.hbm [shape: s32[2,2,128], index: 1, kind: input, shape index: {}]
  %s2 = inlined_call_operand.vmem [shape: f32[1,2,1,12,128], index: 2, kind: output, shape index: {}]
  %s3 = sld [smem:[#allocation0]]
  $region53: #{tpu_custom_call.1} parent=0
    _
  %s5 = ssub.s32 1, %s3
  %s6 = scalar_select 0, %s5, %s3
  $region1: #{tpu_custom_call.1} parent=0
    #allocation2 [shape = 'u8[8192]{0}', space=vmem, size = 0x2000, scoped, tag = 'input window, operand 0']
    #allocation3 [shape = 's32[2]{0}', space=sflag, size = 0x8, scoped, tag = 'scoped memory for tpu_custom_call.1']
    #allocation4 [shape = 'u8[2048]{0}', space=vmem, size = 0x800, scoped, tag = 'input window, operand 1']
    #allocation5 [shape = 's32[2]{0}', space=sflag, size = 0x8, scoped, tag = 'scoped memory for tpu_custom_call.1']
    %7 = vsyncpa [#allocation3], 0
    %s8 = scalar_lea.sflag [#allocation3], 1
    %9 = vsyncpa %s8, 0
    %10 = vsyncpa [#allocation5], 0
    %s11 = scalar_lea.sflag [#allocation5], 1
    %12 = vsyncpa %s11, 0
    loop: start=0, step=1, limit=4
    $region2: #{tpu_custom_call.1} parent=1 // loop_pre_header
      _
    $region3: #{tpu_custom_call.1} parent=1 // loop_header
      %s14 = sphi 0, %s18
      %p15 = scmp.ge.s32.totalorder %s14, 4
      %s21 = sphi 0, %s47
      %s22 = sphi 0, %s43
      %s23 = sphi 0, %s39
      %s24 = sphi 0, %s35
      %s25 = sphi 0, %s21
      %s26 = sphi 0, %s22
      %s27 = sphi 0, %s23
      %s28 = sphi 0, %s24
      %s29 = sphi 0, %s25
      %s30 = sphi 0, %s26
      %s31 = sphi 0, %s27
      %s32 = sphi 0, %s28
      %s60 = sphi 0, %s62
      %s63 = sphi 0, %s60
      %s64 = sphi 0, %s63
      %s80 = sphi 0, %s64
      %s94 = sphi 0, %s96
      %s97 = sphi 0, %s94
      %s98 = sphi 0, %s97
      %s114 = sphi 0, %s98
      %s124 = sphi 0, %s126
      %s127 = sphi 0, %s124
      %s128 = sphi 0, %s127
      %s144 = sphi 0, %s128
    $region4: #{tpu_custom_call.1} parent=1 // loop_header_branch
      %17 = sbr.rel (%p15) target = $region8
    $region5: #{tpu_custom_call.1} parent=1 // loop_body
      %s19 = ssub.s32 %s14, 1
      %s20 = ssub.s32 %s14, 2
      %s33 = sadd.s32 1, %s24
      %p34 = scmp.ge.s32.totalorder %s33, 1
      %s35 = scalar_select %p34, 0, %s33
      %s36 = sadd.s32 1, %s23
      %s37 = scalar_select %p34, %s36, %s23
      %p38 = scmp.ge.s32.totalorder %s37, 1
      %s39 = scalar_select %p38, 0, %s37
      %s40 = sadd.s32 1, %s22
      %s41 = scalar_select %p38, %s40, %s22
      %p42 = scmp.ge.s32.totalorder %s41, 2
      %s43 = scalar_select %p42, 0, %s41
      %s44 = sadd.s32 1, %s21
      %s45 = scalar_select %p42, %s44, %s21
      %p46 = scmp.ge.s32.totalorder %s45, 1
      %s47 = scalar_select %p46, 0, %s45
      %s48 = sadd.s32 %s21, %s24
      %p49 = scmp.lt.s32.totalorder %s48, 0
      %s50 = scalar_select %p49, %s48, 0
      %s51 = sadd.s32 %s47, %s35
      %p52 = scmp.lt.s32.totalorder %s51, 0
      %s53 = scalar_select %p52, %s51, 0
      %s54 = ssub.s32 %s22, %s43
      %s55 = ssub.s32 %s23, %s39
      %s56 = sor.u32 %s54, %s55
      %s57 = ssub.s32 %s50, %s53
      %s58 = sor.u32 %s56, %s57
      %p59 = scmp.eq.s32.totalorder %s58, 0
      %s61 = sadd.s32 %s60, 1
      %s62 = scalar_select %p59, %s60, %s61
      %p65 = pneg %p59
      %p66 = scmp.eq.s32.totalorder %s14, 1
      %p67 = por %p65, %p66
      %p68 = scmp.ne.s32.totalorder %s60, %s63
      %p69 = scmp.eq.s32.totalorder %s14, 0
      %p70 = por %p68, %p69
      %p71 = scmp.ne.s32.totalorder %s60, %s63
      %p72 = scmp.eq.s32.totalorder %s19, 1
      %p73 = por %p71, %p72
      %p74 = scmp.ne.s32.totalorder %s63, %s64
      %p75 = scmp.eq.s32.totalorder %s19, 0
      %p76 = por %p74, %p75
      %p77 = scmp.ne.s32.totalorder %s63, %s64
      %p78 = scmp.eq.s32.totalorder %s20, 1
      %p79 = por %p77, %p78
      %p81 = scmp.ne.s32.totalorder %s64, %s80
      %p82 = scmp.eq.s32.totalorder %s20, 0
      %p83 = por %p81, %p82
      %s84 = sadd.s32 %s21, %s24
      %p85 = scmp.lt.s32.totalorder %s84, 0
      %s86 = scalar_select %p85, %s84, 0
      %s87 = sadd.s32 %s47, %s35
      %p88 = scmp.lt.s32.totalorder %s87, 0
      %s89 = scalar_select %p88, %s87, 0
      %s90 = ssub.s32 %s22, %s43
      %s91 = ssub.s32 %s86, %s89
      %s92 = sor.u32 %s90, %s91
      %p93 = scmp.eq.s32.totalorder %s92, 0
      %s95 = sadd.s32 %s94, 1
      %s96 = scalar_select %p93, %s94, %s95
      %p99 = pneg %p93
      %p100 = scmp.eq.s32.totalorder %s14, 1
      %p101 = por %p99, %p100
      %p102 = scmp.ne.s32.totalorder %s94, %s97
      %p103 = scmp.eq.s32.totalorder %s14, 0
      %p104 = por %p102, %p103
      %p105 = scmp.ne.s32.totalorder %s94, %s97
      %p106 = scmp.eq.s32.totalorder %s19, 1
      %p107 = por %p105, %p106
      %p108 = scmp.ne.s32.totalorder %s97, %s98
      %p109 = scmp.eq.s32.totalorder %s19, 0
      %p110 = por %p108, %p109
      %p111 = scmp.ne.s32.totalorder %s97, %s98
      %p112 = scmp.eq.s32.totalorder %s20, 1
      %p113 = por %p111, %p112
      %p115 = scmp.ne.s32.totalorder %s98, %s114
      %p116 = scmp.eq.s32.totalorder %s20, 0
      %p117 = por %p115, %p116
      %s118 = ssub.s32 %s21, %s47
      %s119 = ssub.s32 %s22, %s43
      %s120 = sor.u32 %s118, %s119
      %s121 = ssub.s32 %s23, %s39
      %s122 = sor.u32 %s120, %s121
      %p123 = scmp.eq.s32.totalorder %s122, 0
      %s125 = sadd.s32 %s124, 1
      %s126 = scalar_select %p123, %s124, %s125
      %p129 = pneg %p123
      %p130 = scmp.eq.s32.totalorder %s14, 1
      %p131 = por %p129, %p130
      %p132 = scmp.ne.s32.totalorder %s124, %s127
      %p133 = scmp.eq.s32.totalorder %s14, 0
      %p134 = por %p132, %p133
      %p135 = scmp.ne.s32.totalorder %s124, %s127
      %p136 = scmp.eq.s32.totalorder %s19, 1
      %p137 = por %p135, %p136
      %p138 = scmp.ne.s32.totalorder %s127, %s128
      %p139 = scmp.eq.s32.totalorder %s19, 0
      %p140 = por %p138, %p139
      %p141 = scmp.ne.s32.totalorder %s127, %s128
      %p142 = scmp.eq.s32.totalorder %s20, 1
      %p143 = por %p141, %p142
      %p145 = scmp.ne.s32.totalorder %s128, %s144
      %p146 = scmp.eq.s32.totalorder %s20, 0
      %p147 = por %p145, %p146
      %p148 = scmp.le.s32.totalorder 1, %s14
      %p149 = scmp.lt.s32.totalorder %s14, 3
      %p150 = pnand %p148, %p149
      %p151 = pneg %p150
      // Predicated region
      $region9: #{tpu_custom_call.1} parent=5 // pred_check
        _
      $region10: #{tpu_custom_call.1} parent=5 // pred_check_branch
        %153 = sbr.rel (%p150) target = $region12
      $region11: #{tpu_custom_call.1} parent=5 // pred_region
        %s154 = ssub.s32 %s14, 1
      $region12: #{tpu_custom_call.1} parent=5 // pred_fallthru
        _
      %p155 = scmp.lt.s32.totalorder %s14, 2
      // Predicated region
      $region13: #{tpu_custom_call.1} parent=5 // pred_check
        %p156 = pneg %p155
      $region14: #{tpu_custom_call.1} parent=5 // pred_check_branch
        %158 = sbr.rel (%p156) target = $region16
      $region15: #{tpu_custom_call.1} parent=5 // pred_region
        // Predicated region
        $region17: #{tpu_custom_call.1} parent=15 // pred_check
          %p159 = pneg %p70
        $region18: #{tpu_custom_call.1} parent=15 // pred_check_branch
          %161 = sbr.rel (%p159) target = $region20
        $region19: #{tpu_custom_call.1} parent=15 // pred_region
          %s162 = sand.u32 %s60, 1
          %s163 = scalar_lea.sflag [#allocation3], %s162
          %s164 = sand.u32 %s60, 1
          %s165 = smul.addr %s164, 8
          %s166 = scalar_lea.vmem [#allocation2], %s165
          %s167 = sadd.s32 %s21, %s24
          %p168 = scmp.lt.s32.totalorder %s167, 0
          %s169 = scalar_select %p168, %s167, 0
          %s170 = smul.u32 4, %s23
          %s172 = ssub.s32 128, 128
          %173 = vsyncadd %s163, %s172
          %s174 = sadd.s32 %s169, %s170
          %s175 = smul.addr %s22, 4
          %s176 = sadd.s32 %s174, %s175
          %s177 = smul.addr %s176, 32
          %s178 = scalar_lea.hbm %s0, %s177
          %s179 = sshll.u32 %s166, 4
          %s180 = int_to_ptr.vmem [resolvable:$true] %s179
          %185 = dma.hbm_to_vmem [thread:$0]  %s178, 128, %s180, %s163, 32, 32, 2
        $region20: #{tpu_custom_call.1} parent=15 // pred_fallthru
          _
        // Predicated region
        $region21: #{tpu_custom_call.1} parent=15 // pred_check
          %p186 = pneg %p104
        $region22: #{tpu_custom_call.1} parent=15 // pred_check_branch
          %188 = sbr.rel (%p186) target = $region24
        $region23: #{tpu_custom_call.1} parent=15 // pred_region
          %s189 = sand.u32 %s94, 1
          %s190 = scalar_lea.sflag [#allocation5], %s189
          %s191 = sand.u32 %s94, 1
          %s192 = smul.addr %s191, 2
          %s193 = scalar_lea.vmem [#allocation4], %s192
          %s194 = sadd.s32 %s21, %s24
          %p195 = scmp.lt.s32.totalorder %s194, 0
          %s196 = scalar_select %p195, %s194, 0
          %s198 = ssub.s32 32, 32
          %199 = vsyncadd %s190, %s198
          %s200 = sadd.s32 %s196, %s22
          %s201 = smul.addr %s200, 32
          %s202 = scalar_lea.hbm %s1, %s201
          %s204 = sshll.u32 %s193, 4
          %s205 = int_to_ptr.vmem [resolvable:$true] %s204
          %207 = dma.hbm_to_vmem [thread:$0]  %s202, 32, %s205, %s190
        $region24: #{tpu_custom_call.1} parent=15 // pred_fallthru
          _
      $region16: #{tpu_custom_call.1} parent=5 // pred_fallthru
        _
      %p208 = scmp.le.s32.totalorder 1, %s14
      %p209 = scmp.lt.s32.totalorder %s14, 3
      %p210 = pnand %p208, %p209
      %p211 = pneg %p210
      // Predicated region
      $region25: #{tpu_custom_call.1} parent=5 // pred_check
        _
      $region26: #{tpu_custom_call.1} parent=5 // pred_check_branch
        %213 = sbr.rel (%p210) target = $region28
      $region27: #{tpu_custom_call.1} parent=5 // pred_region
        %s214 = ssub.s32 %s14, 1
        %s215 = sand.u32 %s63, 1
        %s216 = scalar_lea.sflag [#allocation3], %s215
        %s217 = sand.u32 %s63, 1
        %s218 = smul.addr %s217, 8
        %s219 = scalar_lea.vmem [#allocation2], %s218
        // Predicated region
        $region29: #{tpu_custom_call.1} parent=27 // pred_check
          %p220 = pneg %p76
        $region30: #{tpu_custom_call.1} parent=27 // pred_check_branch
          %222 = sbr.rel (%p220) target = $region32
        $region31: #{tpu_custom_call.1} parent=27 // pred_region
          %223 = dma.done %s216, 128
        $region32: #{tpu_custom_call.1} parent=27 // pred_fallthru
          _
        %s224 = sand.u32 %s97, 1
        %s225 = scalar_lea.sflag [#allocation5], %s224
        %s226 = sand.u32 %s97, 1
        %s227 = smul.addr %s226, 2
        %s228 = scalar_lea.vmem [#allocation4], %s227
        // Predicated region
        $region33: #{tpu_custom_call.1} parent=27 // pred_check
          %p229 = pneg %p110
        $region34: #{tpu_custom_call.1} parent=27 // pred_check_branch
          %231 = sbr.rel (%p229) target = $region36
        $region35: #{tpu_custom_call.1} parent=27 // pred_region
          %232 = dma.done %s225, 32
        $region36: #{tpu_custom_call.1} parent=27 // pred_fallthru
          _
        %s233 = sand.u32 %s63, 1
        %s234 = scalar_lea.sflag [#allocation3], %s233
        %s235 = sand.u32 %s63, 1
        %s236 = smul.addr %s235, 8
        %s237 = scalar_lea.vmem [#allocation2], %s236
        %p238 = pneg %p76
        %p239 = pneg %p73
        %s240 = sand.u32 %s97, 1
        %s241 = scalar_lea.sflag [#allocation5], %s240
        %s242 = sand.u32 %s97, 1
        %s243 = smul.addr %s242, 2
        %s244 = scalar_lea.vmem [#allocation4], %s243
        %p245 = pneg %p110
        %p246 = pneg %p107
        %p247 = pneg %p140
        %p248 = pneg %p137
        %p249 = scmp.lt.s32.totalorder %s25, 0
        %s250 = scalar_select %p249, %s25, 0
        %p251 = scmp.lt.s32.totalorder %s26, 1
        %s252 = scalar_select %p251, %s26, 1
        %p253 = scmp.lt.s32.totalorder %s27, 0
        %s254 = scalar_select %p253, %s27, 0
        %s255 = smul.addr %s254, 2
        %s256 = smul.addr %s252, 2
        %s257 = sadd.s32 %s255, %s256
        %s258 = smul.addr %s250, 4
        %s259 = sadd.s32 %s257, %s258
        %s260 = smul.addr %s259, 8
        %s261 = scalar_lea.vmem %s2, %s260
        %s262 = sadd.s32 %s25, %s28
        %p263 = scmp.lt.s32.totalorder %s262, 0
        %s264 = scalar_select %p263, %s262, 0
        %s265 = smul.u32 4, %s27
        %s266 = sadd.s32 %s25, %s28
        %p267 = scmp.lt.s32.totalorder %s266, 0
        %s268 = scalar_select %p267, %s266, 0
        %p269 = scmp.lt.s32.totalorder %s25, 0
        %s270 = scalar_select %p269, %s25, 0
        %p271 = scmp.lt.s32.totalorder %s26, 1
        %s272 = scalar_select %p271, %s26, 1
        %p273 = scmp.lt.s32.totalorder %s27, 0
        %s274 = scalar_select %p273, %s27, 0
        %s275 = smul.addr %s274, 2
        %s276 = smul.addr %s272, 2
        %s277 = sadd.s32 %s275, %s276
        %s278 = smul.addr %s270, 4
        %s279 = sadd.s32 %s277, %s278
        %s280 = smul.addr %s279, 8
        %s281 = scalar_lea.vmem %s2, %s280
        %p282 = scmp.eq.s32.totalorder %s28, 0
        // Predicated region
        $region37: #{tpu_custom_call.1} parent=27 // pred_check
          %p283 = pneg %p282
        $region38: #{tpu_custom_call.1} parent=27 // pred_check_branch
          %285 = sbr.rel (%p283) target = $region40
        $region39: #{tpu_custom_call.1} parent=27 // pred_region
          %286 = vst [vmem:[%s281] sm:$0xff] 0.0
          %287 = vst [vmem:[%s281 + $0x8] sm:$0xf] 0.0
        $region40: #{tpu_custom_call.1} parent=27 // pred_fallthru
          _
        %v288 = vld [vmem:[%s228] sm:$0x3]
        %s289 = smul.u32 %s27, 4
        %v290 = vld [vmem:[%s219] sm:$0x3]
        %v291 = vstv %s289
        %vm292 = vcmp.eq.s32.totalorder %v288, %v291
        %v293 = vsel %vm292, %v290, 0.0
        %vm294 = vcmask 1041408
        %v295 = vsel %vm294, %v293, 0.0
        %v296 = vrot.slane %v295, 4
        %v297 = vadd.f32 %v295, %v296
        %v298 = vrot.slane %v297, 2
        %v299 = vadd.f32 %v297, %v298
        %v300 = vrot.slane %v299, 1
        %v301 = vadd.f32 %v299, %v300
        %v302 = vsel %vm294, %v290, 0.0
        %v303 = vrot.slane %v302, 4
        %v304 = vadd.f32 %v302, %v303
        %v305 = vrot.slane %v304, 2
        %v306 = vadd.f32 %v304, %v305
        %v307 = vrot.slane %v306, 1
        %v308 = vadd.f32 %v306, %v307
        %v309 = vsel %vm292, 1, 0
        %v310 = vcvt.s32.f32 %v309
        %v311 = vsel %vm294, %v310, 0.0
        %v312 = vrot.slane %v311, 4
        %v313 = vadd.f32 %v311, %v312
        %v314 = vrot.slane %v313, 2
        %v315 = vadd.f32 %v313, %v314
        %v316 = vrot.slane %v315, 1
        %v317 = vadd.f32 %v315, %v316
        %v318 = vld [vmem:[%s281] sm:$0x1]
        %v319 = vadd.f32 %v318, %v301
        %320 = vst [vmem:[%s281] sm:$0x1] %v319
        %v321 = vld [vmem:[%s281 + $0x4] sm:$0x1]
        %v322 = vadd.f32 %v321, %v308
        %323 = vst [vmem:[%s281 + $0x4] sm:$0x1] %v322
        %v324 = vld [vmem:[%s281 + $0x8] sm:$0x1]
        %v325 = vadd.f32 %v324, %v317
        %326 = vst [vmem:[%s281 + $0x8] sm:$0x1] %v325
        %s327 = scalar_lea.vmem %s219, 2 [#allocation2]
        %v328 = vld [vmem:[%s327] sm:$0x3]
        %s329 = sadd.s32 %s289, 1
        %v330 = vstv %s329
        %vm331 = vcmp.eq.s32.totalorder %v288, %v330
        %v332 = vsel %vm331, %v328, 0.0
        %v333 = vsel %vm294, %v332, 0.0
        %v334 = vrot.slane %v333, 4
        %v335 = vadd.f32 %v333, %v334
        %v336 = vrot.slane %v335, 2
        %v337 = vadd.f32 %v335, %v336
        %v338 = vrot.slane %v337, 1
        %v339 = vadd.f32 %v337, %v338
        %v340 = vsel %vm294, %v328, 0.0
        %v341 = vrot.slane %v340, 4
        %v342 = vadd.f32 %v340, %v341
        %v343 = vrot.slane %v342, 2
        %v344 = vadd.f32 %v342, %v343
        %v345 = vrot.slane %v344, 1
        %v346 = vadd.f32 %v344, %v345
        %v347 = vsel %vm331, 1, 0
        %v348 = vcvt.s32.f32 %v347
        %v349 = vsel %vm294, %v348, 0.0
        %v350 = vrot.slane %v349, 4
        %v351 = vadd.f32 %v349, %v350
        %v352 = vrot.slane %v351, 2
        %v353 = vadd.f32 %v351, %v352
        %v354 = vrot.slane %v353, 1
        %v355 = vadd.f32 %v353, %v354
        %v356 = vld [vmem:[%s281 + $0x1] sm:$0x1]
        %v357 = vadd.f32 %v356, %v339
        %358 = vst [vmem:[%s281 + $0x1] sm:$0x1] %v357
        %v359 = vld [vmem:[%s281 + $0x5] sm:$0x1]
        %v360 = vadd.f32 %v359, %v346
        %361 = vst [vmem:[%s281 + $0x5] sm:$0x1] %v360
        %v362 = vld [vmem:[%s281 + $0x9] sm:$0x1]
        %v363 = vadd.f32 %v362, %v355
        %364 = vst [vmem:[%s281 + $0x9] sm:$0x1] %v363
        %s365 = scalar_lea.vmem %s219, 4 [#allocation2]
        %v366 = vld [vmem:[%s365] sm:$0x3]
        %s367 = sadd.s32 %s289, 2
        %v368 = vstv %s367
        %vm369 = vcmp.eq.s32.totalorder %v288, %v368
        %v370 = vsel %vm369, %v366, 0.0
        %v371 = vsel %vm294, %v370, 0.0
        %v372 = vrot.slane %v371, 4
        %v373 = vadd.f32 %v371, %v372
        %v374 = vrot.slane %v373, 2
        %v375 = vadd.f32 %v373, %v374
        %v376 = vrot.slane %v375, 1
        %v377 = vadd.f32 %v375, %v376
        %v378 = vsel %vm294, %v366, 0.0
        %v379 = vrot.slane %v378, 4
        %v380 = vadd.f32 %v378, %v379
        %v381 = vrot.slane %v380, 2
        %v382 = vadd.f32 %v380, %v381
        %v383 = vrot.slane %v382, 1
        %v384 = vadd.f32 %v382, %v383
        %v385 = vsel %vm369, 1, 0
        %v386 = vcvt.s32.f32 %v385
        %v387 = vsel %vm294, %v386, 0.0
        %v388 = vrot.slane %v387, 4
        %v389 = vadd.f32 %v387, %v388
        %v390 = vrot.slane %v389, 2
        %v391 = vadd.f32 %v389, %v390
        %v392 = vrot.slane %v391, 1
        %v393 = vadd.f32 %v391, %v392
        %v394 = vld [vmem:[%s281 + $0x2] sm:$0x1]
        %v395 = vadd.f32 %v394, %v377
        %396 = vst [vmem:[%s281 + $0x2] sm:$0x1] %v395
        %v397 = vld [vmem:[%s281 + $0x6] sm:$0x1]
        %v398 = vadd.f32 %v397, %v384
        %399 = vst [vmem:[%s281 + $0x6] sm:$0x1] %v398
        %v400 = vld [vmem:[%s281 + $0xa] sm:$0x1]
        %v401 = vadd.f32 %v400, %v393
        %402 = vst [vmem:[%s281 + $0xa] sm:$0x1] %v401
        %s403 = scalar_lea.vmem %s219, 6 [#allocation2]
        %v404 = vld [vmem:[%s403] sm:$0x3]
        %s405 = sadd.s32 %s289, 3
        %v406 = vstv %s405
        %vm407 = vcmp.eq.s32.totalorder %v288, %v406
        %v408 = vsel %vm407, %v404, 0.0
        %v409 = vsel %vm294, %v408, 0.0
        %v410 = vrot.slane %v409, 4
        %v411 = vadd.f32 %v409, %v410
        %v412 = vrot.slane %v411, 2
        %v413 = vadd.f32 %v411, %v412
        %v414 = vrot.slane %v413, 1
        %v415 = vadd.f32 %v413, %v414
        %v416 = vsel %vm294, %v404, 0.0
        %v417 = vrot.slane %v416, 4
        %v418 = vadd.f32 %v416, %v417
        %v419 = vrot.slane %v418, 2
        %v420 = vadd.f32 %v418, %v419
        %v421 = vrot.slane %v420, 1
        %v422 = vadd.f32 %v420, %v421
        %v423 = vsel %vm407, 1, 0
        %v424 = vcvt.s32.f32 %v423
        %v425 = vsel %vm294, %v424, 0.0
        %v426 = vrot.slane %v425, 4
        %v427 = vadd.f32 %v425, %v426
        %v428 = vrot.slane %v427, 2
        %v429 = vadd.f32 %v427, %v428
        %v430 = vrot.slane %v429, 1
        %v431 = vadd.f32 %v429, %v430
        %v432 = vld [vmem:[%s281 + $0x3] sm:$0x1]
        %v433 = vadd.f32 %v432, %v415
        %434 = vst [vmem:[%s281 + $0x3] sm:$0x1] %v433
        %v435 = vld [vmem:[%s281 + $0x7] sm:$0x1]
        %v436 = vadd.f32 %v435, %v422
        %437 = vst [vmem:[%s281 + $0x7] sm:$0x1] %v436
        %v438 = vld [vmem:[%s281 + $0xb] sm:$0x1]
        %v439 = vadd.f32 %v438, %v431
        %440 = vst [vmem:[%s281 + $0xb] sm:$0x1] %v439
        %p441 = scmp.lt.s32.totalorder %s25, 0
        %s442 = scalar_select %p441, %s25, 0
        %p443 = scmp.lt.s32.totalorder %s26, 1
        %s444 = scalar_select %p443, %s26, 1
        %p445 = scmp.lt.s32.totalorder %s27, 0
        %s446 = scalar_select %p445, %s27, 0
        %s447 = smul.addr %s446, 2
        %s448 = smul.addr %s444, 2
        %s449 = sadd.s32 %s447, %s448
        %s450 = smul.addr %s442, 4
        %s451 = sadd.s32 %s449, %s450
        %s452 = smul.addr %s451, 8
        %s453 = scalar_lea.vmem %s2, %s452
        // Predicated region
        $region41: #{tpu_custom_call.1} parent=27 // pred_check
          %p454 = pneg %p137
        $region42: #{tpu_custom_call.1} parent=27 // pred_check_branch
          %456 = sbr.rel (%p454) target = $region44
        $region43: #{tpu_custom_call.1} parent=27 // pred_region
          _
        $region44: #{tpu_custom_call.1} parent=27 // pred_fallthru
          _
      $region28: #{tpu_custom_call.1} parent=5 // pred_fallthru
        _
      %p457 = scmp.le.s32.totalorder 2, %s14
      // Predicated region
      $region45: #{tpu_custom_call.1} parent=5 // pred_check
        %p458 = pneg %p457
      $region46: #{tpu_custom_call.1} parent=5 // pred_check_branch
        %460 = sbr.rel (%p458) target = $region48
      $region47: #{tpu_custom_call.1} parent=5 // pred_region
        %s461 = ssub.s32 %s14, 2
        // Predicated region
        $region49: #{tpu_custom_call.1} parent=47 // pred_check
          %p462 = pneg %p143
        $region50: #{tpu_custom_call.1} parent=47 // pred_check_branch
          %464 = sbr.rel (%p462) target = $region52
        $region51: #{tpu_custom_call.1} parent=47 // pred_region
          %p465 = scmp.lt.s32.totalorder %s29, 0
          %s466 = scalar_select %p465, %s29, 0
          %p467 = scmp.lt.s32.totalorder %s30, 1
          %s468 = scalar_select %p467, %s30, 1
          %p469 = scmp.lt.s32.totalorder %s31, 0
          %s470 = scalar_select %p469, %s31, 0
          %s471 = smul.addr %s470, 2
          %s472 = smul.addr %s468, 2
          %s473 = sadd.s32 %s471, %s472
          %s474 = smul.addr %s466, 4
          %s475 = sadd.s32 %s473, %s474
          %s476 = smul.addr %s475, 8
          %s477 = scalar_lea.vmem %s2, %s476
        $region52: #{tpu_custom_call.1} parent=47 // pred_fallthru
          _
      $region48: #{tpu_custom_call.1} parent=5 // pred_fallthru
        _
    $region6: #{tpu_custom_call.1} parent=1 // loop_footer
      %s18 = sadd.s32 1, %s14
    $region7: #{tpu_custom_call.1} parent=1 // loop_footer_branch
      %13 = sbr.rel target = $region3
    $region8: #{tpu_custom_call.1} parent=1 // loop_exit
      _
    %478 = vsyncpa [#allocation3], 1
    %s479 = scalar_lea.sflag [#allocation3], 1
    %480 = vsyncpa %s479, 1
    %481 = vsyncpa [#allocation5], 1
    %s482 = scalar_lea.sflag [#allocation5], 1
    %483 = vsyncpa %s482, 1

</llo_original>
